<compile_context>
chip_gen: v7x
topology: tpu7x:2x2x1
jax: 0.10.0
libtpu: 0.0.40
codegen_flags: <defaults>
</compile_context>

<pallas_src>
import functools

import jax
import jax.numpy as jnp
from jax import lax
from jax.experimental import pallas as pl
from jax.experimental.pallas import tpu as pltpu

_LANE = 128


def _round_up(x, m):
    return ((x + m - 1) // m) * m


def _use_bf16_transcendentals():
    """bf16 tanh on v6e/v7x (bf16 EUP); f32 on v5e and older (no bf16 EUP)."""
    try:
        kind = jax.devices()[0].device_kind.lower()
    except Exception:
        return False
    return not any(old in kind for old in ("v2", "v3", "v4", "v5"))


def _make_decoder_kernel(n_hidden, act_dtype):
    """Kernel for `n_hidden` tanh hidden layers + sigmoid output layer.

    Ref order:
        code, (w_0, b_0, ..., w_{n-1}, b_{n-1}), w_out, b_out, out
    code block is (tb, code_size) f32 (native layout); W_i is PyTorch-layout
    (out_features, in_features) bf16; b_i is (out_features, 1) f32.
    The first matmul contracts dim 1 of both operands, producing the
    transposed (features, tb) activation; from then on each layer is W @ h + b
    with the batch tile on the 128-lane axis (lane-dense output stores).
    """
    bf16_act = act_dtype == jnp.bfloat16

    def kernel(*refs):
        code_ref = refs[0]
        param_refs = refs[1:-1]
        out_ref = refs[-1]

        n_layers = n_hidden + 1
        h = code_ref[...].astype(jnp.bfloat16)          # (tb, code_size)
        transposed = False

        for i in range(n_layers):
            w = param_refs[2 * i][...]                  # (out, in)  bf16
            b = param_refs[2 * i + 1][...]              # (out, 1)   f32
            if transposed:
                acc = jnp.dot(w, h, preferred_element_type=jnp.float32) + b
            else:
                # contract dim 1 of both: (out, in) x (tb, in) -> (out, tb)
                acc = lax.dot_general(
                    w, h, (((1,), (1,)), ((), ())),
                    preferred_element_type=jnp.float32) + b
                transposed = True

            if i < n_hidden:
                if bf16_act:
                    h = jnp.tanh(acc.astype(jnp.bfloat16))      # bf16 EUP
                else:
                    h = jnp.tanh(acc).astype(jnp.bfloat16)      # f32 EUP (v5e)
            else:
                # sigmoid(x) = 0.5 * (tanh(0.5 * x) + 1): single EUP push.
                z = 0.5 * acc
                if bf16_act:
                    z = z.astype(jnp.bfloat16)
                out_ref[...] = (0.5 * (jnp.tanh(z) + 1.0)).astype(out_ref.dtype)

    return kernel


def decoder_forward(code, params, output_size, *, batch_tile=4096,
                    out_dtype=jnp.bfloat16, transpose_output=True):
    """Decoder forward pass as a single batch-tiled Pallas TPU kernel.

    code:   (batch, code_size) float array (passed to the kernel as-is).
    params: list of (W, b) with W in PyTorch nn.Linear layout
            (out_features, in_features) and b of shape (out_features,).
            Last tuple is the SingleOutput (sigmoid) layer; earlier tuples are
            tanh hidden layers.
    Returns (batch, output_size) if transpose_output else the kernel's native
    lane-dense (output_size, batch) layout (cheaper for fused consumers).
    """
    batch, code_size = code.shape
    n_hidden = len(params) - 1
    act_dtype = jnp.bfloat16 if _use_bf16_transcendentals() else jnp.float32
    kernel = _make_decoder_kernel(n_hidden, act_dtype)

    flat_params = []
    for w, b in params:
        flat_params.append(w.astype(jnp.bfloat16))                 # (out, in)
        flat_params.append(b.reshape(-1, 1).astype(jnp.float32))   # (out, 1)

    # --- batch tile selection ----------------------------------------------
    if batch <= _LANE:
        tb = batch                       # single full-array block (no padding)
    else:
        # Large tiles amortize the ~0.35us/step overhead; keep >=2 grid steps
        # so both TensorCores on v7x get work via dimension_semantics.
        tb = min(batch_tile, _round_up(pl.cdiv(batch, 2), _LANE))
        tb = max(tb, _LANE)
    grid = (pl.cdiv(batch, tb),)         # partial last block masked by Pallas

    # code/out are batch-tiled (auto-pipelined); params stay VMEM-resident.
    code_spec = pl.BlockSpec((tb, code_size), lambda i: (i, 0))
    out_spec = pl.BlockSpec((output_size, tb), lambda i: (0, i))
    param_specs = [pl.BlockSpec(p.shape, lambda i: (0, 0)) for p in flat_params]

    out_t = pl.pallas_call(
        kernel,
        out_shape=jax.ShapeDtypeStruct((output_size, batch), out_dtype),
        grid=grid,
        in_specs=[code_spec] + param_specs,
        out_specs=out_spec,
        compiler_params=pltpu.CompilerParams(
            dimension_semantics=("parallel",),
            vmem_limit_bytes=32 * 1024 * 1024,   # headroom for v5e's 16 MiB default
        ),
    )(code, *flat_params)

    if transpose_output:
        return out_t.T                    # (batch, output_size), module layout
    return out_t                          # (output_size, batch), lane-dense


def init_decoder_params(key, code_size, hidden_sizes, output_size):
    """Deterministic synthetic init matching nn.Linear shapes: W (out, in), b (out,)."""
    params = []
    sizes = [code_size] + list(hidden_sizes) + [output_size]
    for i in range(len(sizes) - 1):
        fan_in, fan_out = sizes[i], sizes[i + 1]
        key, kw, kb = jax.random.split(key, 3)
        bound = 1.0 / jnp.sqrt(jnp.float32(fan_in))
        w = jax.random.uniform(kw, (fan_out, fan_in), jnp.float32, -bound, bound)
        b = jax.random.uniform(kb, (fan_out,), jnp.float32, -bound, bound)
        params.append((w, b))
    return params


def decoder_reference(code, params):
    """Pure-JAX f32 reference for correctness checking."""
    h = code
    for w, b in params[:-1]:
        h = jnp.tanh(h @ w.T + b)
    wo, bo = params[-1]
    return jax.nn.sigmoid(h @ wo.T + bo)


if __name__ == "__main__":
    # Decoder(code_size=32, output_size=16, hidden_sizes=[64, 48], variable_sizes=None)
    batch = 8
    code_size = 32
    hidden_sizes = [64, 48]
    output_size = 16

    key = jax.random.PRNGKey(0)
    key, kcode = jax.random.split(key)
    code = jax.random.normal(kcode, (batch, code_size), dtype=jnp.float32)
    params = init_decoder_params(key, code_size, hidden_sizes, output_size)

    fwd = jax.jit(functools.partial(decoder_forward, output_size=output_size))
    out = jax.block_until_ready(fwd(code, params))

    ref = decoder_reference(code, params)
    assert out.shape == (batch, output_size)
    # bf16 matmul inputs / bf16 transcendentals / bf16 output vs f32 reference.
    assert jnp.allclose(out.astype(jnp.float32), ref, atol=3e-2, rtol=3e-2), \
        "mismatch vs reference"

    print("KERNEL_OK")
</pallas_src>

<mosaic_0001>
module attributes {stable_mosaic.version = 11 : i64} {
  func.func @kernel(%arg0: i32, %arg1: memref<8x32xf32, #tpu.memory_space<vmem>>, %arg2: memref<64x32xbf16, #tpu.memory_space<vmem>>, %arg3: memref<64x1xf32, #tpu.memory_space<vmem>>, %arg4: memref<48x64xbf16, #tpu.memory_space<vmem>>, %arg5: memref<48x1xf32, #tpu.memory_space<vmem>>, %arg6: memref<16x48xbf16, #tpu.memory_space<vmem>>, %arg7: memref<16x1xf32, #tpu.memory_space<vmem>>, %arg8: memref<16x8xbf16, #tpu.memory_space<vmem>>) attributes {dimension_semantics = [#tpu.dimension_semantics<parallel>], iteration_bounds = array<i64: 1>, scalar_prefetch = 0 : i64, scratch_operands = 0 : i64, tpu.core_type = #tpu.core_type<tc>, window_params = [{transform_indices = @transform_0, window_bounds = array<i64: 8, 32>}, {pipeline_mode = #tpu.pipeline_mode<synchronous>, transform_indices = @transform_1, window_bounds = array<i64: 64, 32>}, {pipeline_mode = #tpu.pipeline_mode<synchronous>, transform_indices = @transform_2, window_bounds = array<i64: 64, 1>}, {pipeline_mode = #tpu.pipeline_mode<synchronous>, transform_indices = @transform_3, window_bounds = array<i64: 48, 64>}, {pipeline_mode = #tpu.pipeline_mode<synchronous>, transform_indices = @transform_4, window_bounds = array<i64: 48, 1>}, {pipeline_mode = #tpu.pipeline_mode<synchronous>, transform_indices = @transform_5, window_bounds = array<i64: 16, 48>}, {pipeline_mode = #tpu.pipeline_mode<synchronous>, transform_indices = @transform_6, window_bounds = array<i64: 16, 1>}, {transform_indices = @transform_7, window_bounds = array<i64: 16, 8>}]} {
    %c0 = arith.constant 0 : index
    %c0_0 = arith.constant 0 : index
    %0 = vector.load %arg1[%c0, %c0_0] : memref<8x32xf32, #tpu.memory_space<vmem>>, vector<8x32xf32>
    %1 = arith.truncf %0 : vector<8x32xf32> to vector<8x32xbf16>
    %c0_1 = arith.constant 0 : index
    %c0_2 = arith.constant 0 : index
    %2 = vector.load %arg2[%c0_1, %c0_2] : memref<64x32xbf16, #tpu.memory_space<vmem>>, vector<64x32xbf16>
    %c0_3 = arith.constant 0 : index
    %c0_4 = arith.constant 0 : index
    %3 = vector.load %arg3[%c0_3, %c0_4] : memref<64x1xf32, #tpu.memory_space<vmem>>, vector<64x1xf32>
    %cst = arith.constant dense<0.000000e+00> : vector<64x8xf32>
    %4 = tpu.matmul %2, %1, %cst {dimension_numbers = #tpu.dot_dimension_numbers<[1], [1], [0], [0], [0, 0, 1, 0], [], []>} : vector<64x32xbf16>, vector<8x32xbf16>, vector<64x8xf32> -> vector<64x8xf32>
    %5 = vector.broadcast %3 : vector<64x1xf32> to vector<64x8xf32>
    %6 = arith.addf %4, %5 : vector<64x8xf32>
    %7 = arith.truncf %6 : vector<64x8xf32> to vector<64x8xbf16>
    %8 = math.tanh %7 : vector<64x8xbf16>
    %c0_5 = arith.constant 0 : index
    %c0_6 = arith.constant 0 : index
    %9 = vector.load %arg4[%c0_5, %c0_6] : memref<48x64xbf16, #tpu.memory_space<vmem>>, vector<48x64xbf16>
    %c0_7 = arith.constant 0 : index
    %c0_8 = arith.constant 0 : index
    %10 = vector.load %arg5[%c0_7, %c0_8] : memref<48x1xf32, #tpu.memory_space<vmem>>, vector<48x1xf32>
    %cst_9 = arith.constant dense<0.000000e+00> : vector<48x8xf32>
    %11 = tpu.matmul %9, %8, %cst_9 {dimension_numbers = #tpu.dot_dimension_numbers<[1], [0], [0], [1], [0, 0, 1, 1], [], []>} : vector<48x64xbf16>, vector<64x8xbf16>, vector<48x8xf32> -> vector<48x8xf32>
    %12 = vector.broadcast %10 : vector<48x1xf32> to vector<48x8xf32>
    %13 = arith.addf %11, %12 : vector<48x8xf32>
    %14 = arith.truncf %13 : vector<48x8xf32> to vector<48x8xbf16>
    %15 = math.tanh %14 : vector<48x8xbf16>
    %c0_10 = arith.constant 0 : index
    %c0_11 = arith.constant 0 : index
    %16 = vector.load %arg6[%c0_10, %c0_11] : memref<16x48xbf16, #tpu.memory_space<vmem>>, vector<16x48xbf16>
    %c0_12 = arith.constant 0 : index
    %c0_13 = arith.constant 0 : index
    %17 = vector.load %arg7[%c0_12, %c0_13] : memref<16x1xf32, #tpu.memory_space<vmem>>, vector<16x1xf32>
    %cst_14 = arith.constant dense<0.000000e+00> : vector<16x8xf32>
    %18 = tpu.matmul %16, %15, %cst_14 {dimension_numbers = #tpu.dot_dimension_numbers<[1], [0], [0], [1], [0, 0, 1, 1], [], []>} : vector<16x48xbf16>, vector<48x8xbf16>, vector<16x8xf32> -> vector<16x8xf32>
    %19 = vector.broadcast %17 : vector<16x1xf32> to vector<16x8xf32>
    %20 = arith.addf %18, %19 : vector<16x8xf32>
    %cst_15 = arith.constant 5.000000e-01 : f32
    %21 = vector.broadcast %cst_15 : f32 to vector<16x8xf32>
    %22 = arith.mulf %21, %20 : vector<16x8xf32>
    %23 = arith.truncf %22 : vector<16x8xf32> to vector<16x8xbf16>
    %24 = math.tanh %23 : vector<16x8xbf16>
    %cst_16 = arith.constant 1.000000e+00 : bf16
    %25 = vector.broadcast %cst_16 : bf16 to vector<16x8xbf16>
    %26 = arith.addf %24, %25 : vector<16x8xbf16>
    %cst_17 = arith.constant 5.000000e-01 : bf16
    %27 = vector.broadcast %cst_17 : bf16 to vector<16x8xbf16>
    %28 = arith.mulf %27, %26 : vector<16x8xbf16>
    %c0_18 = arith.constant 0 : index
    %c0_19 = arith.constant 0 : index
    %29 = vector.load %arg8[%c0_18, %c0_19] : memref<16x8xbf16, #tpu.memory_space<vmem>>, vector<16x8xbf16>
    tpu.vector_store %arg8[%c0_18, %c0_19], %28 {strides = array<i32>} : memref<16x8xbf16, #tpu.memory_space<vmem>>, vector<16x8xbf16>,
    return
  }
  func.func @transform_0(%arg0: i32) -> (i32, i32) {
    %c0_i32 = arith.constant 0 : i32
    %c0_i32_0 = arith.constant 0 : i32
    return %arg0, %c0_i32 : i32, i32
  }
  func.func @transform_1(%arg0: i32) -> (i32, i32) {
    %c0_i32 = arith.constant 0 : i32
    %c0_i32_0 = arith.constant 0 : i32
    %c0_i32_1 = arith.constant 0 : i32
    return %c0_i32, %c0_i32_0 : i32, i32
  }
  func.func @transform_2(%arg0: i32) -> (i32, i32) {
    %c0_i32 = arith.constant 0 : i32
    %c0_i32_0 = arith.constant 0 : i32
    %c0_i32_1 = arith.constant 0 : i32
    return %c0_i32, %c0_i32_0 : i32, i32
  }
  func.func @transform_3(%arg0: i32) -> (i32, i32) {
    %c0_i32 = arith.constant 0 : i32
    %c0_i32_0 = arith.constant 0 : i32
    %c0_i32_1 = arith.constant 0 : i32
    return %c0_i32, %c0_i32_0 : i32, i32
  }
  func.func @transform_4(%arg0: i32) -> (i32, i32) {
    %c0_i32 = arith.constant 0 : i32
    %c0_i32_0 = arith.constant 0 : i32
    %c0_i32_1 = arith.constant 0 : i32
    return %c0_i32, %c0_i32_0 : i32, i32
  }
  func.func @transform_5(%arg0: i32) -> (i32, i32) {
    %c0_i32 = arith.constant 0 : i32
    %c0_i32_0 = arith.constant 0 : i32
    %c0_i32_1 = arith.constant 0 : i32
    return %c0_i32, %c0_i32_0 : i32, i32
  }
  func.func @transform_6(%arg0: i32) -> (i32, i32) {
    %c0_i32 = arith.constant 0 : i32
    %c0_i32_0 = arith.constant 0 : i32
    %c0_i32_1 = arith.constant 0 : i32
    return %c0_i32, %c0_i32_0 : i32, i32
  }
  func.func @transform_7(%arg0: i32) -> (i32, i32) {
    %c0_i32 = arith.constant 0 : i32
    %c0_i32_0 = arith.constant 0 : i32
    return %c0_i32, %arg0 : i32, i32
  }
}

</mosaic_0001>

<llo_original>
// kernel: decoder_forward.1
$region0: #{decoder_forward.1}
  #allocation0 [shape = 'u32[]', space=smem, size = 0x4, offset = 0x4, fixed_abs, tag = 'smem constant byte address 0x4 - core index']
  #allocation1 [shape = 'u32[144,128]{1,0:T(1,128)}', space=vmem, size = 0x12000, scoped, tag = 'internal scratch']
  %s0 = inlined_call_operand.vmem [shape: f32[8,32], index: 0, kind: input, shape index: {}]
  %s1 = inlined_call_operand.vmem [shape: bf16[64,32], index: 1, kind: input, shape index: {}]
  %s2 = inlined_call_operand.vmem [shape: f32[64,1], index: 2, kind: input, shape index: {}]
  %s3 = inlined_call_operand.vmem [shape: bf16[48,64], index: 3, kind: input, shape index: {}]
  %s4 = inlined_call_operand.vmem [shape: f32[48,1], index: 4, kind: input, shape index: {}]
  %s5 = inlined_call_operand.vmem [shape: bf16[16,48], index: 5, kind: input, shape index: {}]
  %s6 = inlined_call_operand.vmem [shape: f32[16,1], index: 6, kind: input, shape index: {}]
  %s7 = inlined_call_operand.vmem [shape: bf16[16,8], index: 7, kind: output, shape index: {}]
  %s8 = sld [smem:[#allocation0]]
  $region38: #{decoder_forward.1} parent=0
    _
  %s10 = ssub.s32 1, %s8
  %s11 = scalar_select 0, %s10, %s8
  // Predicated region
  $region2: #{decoder_forward.1} parent=0 // pred_check
    _
  $region3: #{decoder_forward.1} parent=0 // pred_check_branch
    %13 = sbr.rel (0) target = $region5
  $region4: #{decoder_forward.1} parent=0 // pred_region
    _
  $region5: #{decoder_forward.1} parent=0 // pred_fallthru
    _
  // Predicated region
  $region6: #{decoder_forward.1} parent=0 // pred_check
    _
  $region7: #{decoder_forward.1} parent=0 // pred_check_branch
    %15 = sbr.rel (0) target = $region9
  $region8: #{decoder_forward.1} parent=0 // pred_region
    _
  $region9: #{decoder_forward.1} parent=0 // pred_fallthru
    _
  // Predicated region
  $region10: #{decoder_forward.1} parent=0 // pred_check
    _
  $region11: #{decoder_forward.1} parent=0 // pred_check_branch
    %17 = sbr.rel (0) target = $region13
  $region12: #{decoder_forward.1} parent=0 // pred_region
    _
  $region13: #{decoder_forward.1} parent=0 // pred_fallthru
    _
  // Predicated region
  $region14: #{decoder_forward.1} parent=0 // pred_check
    _
  $region15: #{decoder_forward.1} parent=0 // pred_check_branch
    %19 = sbr.rel (0) target = $region17
  $region16: #{decoder_forward.1} parent=0 // pred_region
    _
  $region17: #{decoder_forward.1} parent=0 // pred_fallthru
    _
  // Predicated region
  $region18: #{decoder_forward.1} parent=0 // pred_check
    _
  $region19: #{decoder_forward.1} parent=0 // pred_check_branch
    %21 = sbr.rel (0) target = $region21
  $region20: #{decoder_forward.1} parent=0 // pred_region
    _
  $region21: #{decoder_forward.1} parent=0 // pred_fallthru
    _
  // Predicated region
  $region22: #{decoder_forward.1} parent=0 // pred_check
    _
  $region23: #{decoder_forward.1} parent=0 // pred_check_branch
    %23 = sbr.rel (0) target = $region25
  $region24: #{decoder_forward.1} parent=0 // pred_region
    _
  $region25: #{decoder_forward.1} parent=0 // pred_fallthru
    _
  // Predicated region
  $region26: #{decoder_forward.1} parent=0 // pred_check
    _
  $region27: #{decoder_forward.1} parent=0 // pred_check_branch
    %25 = sbr.rel (0) target = $region29
  $region28: #{decoder_forward.1} parent=0 // pred_region
    _
  $region29: #{decoder_forward.1} parent=0 // pred_fallthru
    _
  %v29 = vld [vmem:[%s0] sm:$0xff]
  %v30 = vpack.c.bf16 %v29, %v29
  %v31 = vld [vmem:[%s1] sm:$0xf]
  %v32 = vld [vmem:[%s1 + $0x4] sm:$0xf]
  %v33 = vld [vmem:[%s1 + $0x8] sm:$0xf]
  %v34 = vld [vmem:[%s1 + $0xc] sm:$0xf]
  %v35 = vld [vmem:[%s1 + $0x10] sm:$0xf]
  %v36 = vld [vmem:[%s1 + $0x14] sm:$0xf]
  %v37 = vld [vmem:[%s1 + $0x18] sm:$0xf]
  %v38 = vld [vmem:[%s1 + $0x1c] sm:$0xf]
  %v39 = vld [vmem:[%s2] sm:$0xff]
  %v40 = vld [vmem:[%s2 + $0x8] sm:$0xff]
  %v41 = vld [vmem:[%s2 + $0x10] sm:$0xff]
  %v42 = vld [vmem:[%s2 + $0x18] sm:$0xff]
  %v43 = vld [vmem:[%s2 + $0x20] sm:$0xff]
  %v44 = vld [vmem:[%s2 + $0x28] sm:$0xff]
  %v45 = vld [vmem:[%s2 + $0x30] sm:$0xff]
  %v46 = vld [vmem:[%s2 + $0x38] sm:$0xff]
  %48 = vset.pattern.permute.xlu0 0
  %49 = vperm.xlu0 %48, %v39
  %v50 = vpop.permute.xlu0 %49
  %53 = vset.pattern.permute.xlu0 0
  %54 = vperm.xlu0 %53, %v40
  %v55 = vpop.permute.xlu0 %54
  %58 = vset.pattern.permute.xlu0 0
  %59 = vperm.xlu0 %58, %v41
  %v60 = vpop.permute.xlu0 %59
  %63 = vset.pattern.permute.xlu0 0
  %64 = vperm.xlu0 %63, %v42
  %v65 = vpop.permute.xlu0 %64
  %68 = vset.pattern.permute.xlu0 0
  %69 = vperm.xlu0 %68, %v43
  %v70 = vpop.permute.xlu0 %69
  %73 = vset.pattern.permute.xlu0 0
  %74 = vperm.xlu0 %73, %v44
  %v75 = vpop.permute.xlu0 %74
  %78 = vset.pattern.permute.xlu0 0
  %79 = vperm.xlu0 %78, %v45
  %v80 = vpop.permute.xlu0 %79
  %83 = vset.pattern.permute.xlu0 0
  %84 = vperm.xlu0 %83, %v46
  %v85 = vpop.permute.xlu0 %84
  %v95 = vunpack.c.l.b16 %v31
  %v96 = vunpack.c.l.b16 %v32
  %v97 = vunpack.c.l.b16 %v33
  %v98 = vunpack.c.l.b16 %v34
  %v99 = vunpack.c.l.b16 %v35
  %v100 = vunpack.c.l.b16 %v36
  %v101 = vunpack.c.l.b16 %v37
  %v102 = vunpack.c.l.b16 %v38
  %v103 = vpack.c.b16 %v96, %v95
  %v104 = vpack.c.b16 %v98, %v97
  %v105 = vpack.c.b16 %v100, %v99
  %v106 = vpack.c.b16 %v102, %v101
  %vm107 = vcmask 261120
  %v109 = vsel %vm107, %v103, 0
  %v112 = vsel %vm107, %v104, 0
  %v115 = vsel %vm107, %v105, 0
  %v118 = vsel %vm107, %v106, 0
  %v121 = vsel %vm107, %v30, 0
  %123 = vmatprep.subr.bf16.mxu0 0
  %124 = vmatpush1.bf16.xpose.msra.mxu0 %v121
  %125 = vmatprep.subr.bf16.mxu0 0
  %126 = vmatpush1.bf16.xpose.msra.mxu0 0
  %127 = vmatprep.subr.bf16.mxu0 0
  %128 = vmatpush1.bf16.xpose.msra.mxu0 0
  %129 = vmatprep.subr.bf16.mxu0 0
  %130 = vmatpush1.bf16.xpose.msra.mxu0 0
  %131 = vmatprep.subr.bf16.mxu0 0
  %132 = vmatpush1.bf16.xpose.msra.mxu0 0
  %133 = vmatprep.subr.bf16.mxu0 0
  %134 = vmatpush1.bf16.xpose.msra.mxu0 0
  %135 = vmatprep.subr.bf16.mxu0 0
  %136 = vmatpush1.bf16.xpose.msra.mxu0 0
  %137 = vmatprep.subr.bf16.mxu0 0
  %138 = vmatpush1.bf16.xpose.msra.mxu0 0
  %139 = vmatprep.subr.bf16.mxu0 0
  %140 = vmatpush1.bf16.xpose.msra.mxu0 0
  %141 = vmatprep.subr.bf16.mxu0 0
  %142 = vmatpush1.bf16.xpose.msra.mxu0 0
  %143 = vmatprep.subr.bf16.mxu0 0
  %144 = vmatpush1.bf16.xpose.msra.mxu0 0
  %145 = vmatprep.subr.bf16.mxu0 0
  %146 = vmatpush1.bf16.xpose.msra.mxu0 0
  %147 = vmatprep.subr.bf16.mxu0 0
  %148 = vmatpush1.bf16.xpose.msra.mxu0 0
  %149 = vmatprep.subr.bf16.mxu0 0
  %150 = vmatpush1.bf16.xpose.msra.mxu0 0
  %151 = vmatprep.subr.bf16.mxu0 0
  %152 = vmatpush1.bf16.xpose.msra.mxu0 0
  %153 = vmatprep.subr.bf16.mxu0 0
  %154 = vmatpush1.bf16.xpose.msra.mxu0 0
  %155 = vmatprep.mubr.bf16.mxu0 0
  %156 = vmatmul.mubr.bf16.gmra.mrb[0].mxu0 %v109
  %v157 = vpop.f32.mrb[0].mxu0
  %v158 = vadd.f32 %v50, %v157
  %v159 = vpop.f32.mrb[0].mxu0
  %v160 = vpop.f32.mrb[0].mxu0
  %v161 = vadd.f32 %v55, %v160
  %v162 = vpop.f32.mrb[0].mxu0
  %163 = vmatprep.mubr.bf16.mxu0 0
  %164 = vmatmul.mubr.bf16.gmra.mrb[0].mxu0 %v112
  %v165 = vpop.f32.mrb[0].mxu0
  %v166 = vadd.f32 %v60, %v165
  %v167 = vpop.f32.mrb[0].mxu0
  %v168 = vpop.f32.mrb[0].mxu0
  %v169 = vadd.f32 %v65, %v168
  %v170 = vpop.f32.mrb[0].mxu0
  %171 = vmatprep.mubr.bf16.mxu0 0
  %172 = vmatmul.mubr.bf16.gmra.mrb[0].mxu0 %v115
  %v173 = vpop.f32.mrb[0].mxu0
  %v174 = vadd.f32 %v70, %v173
  %v175 = vpop.f32.mrb[0].mxu0
  %v176 = vpop.f32.mrb[0].mxu0
  %v177 = vadd.f32 %v75, %v176
  %v178 = vpop.f32.mrb[0].mxu0
  %179 = vmatprep.mubr.bf16.mxu0 0
  %180 = vmatmul.mubr.bf16.gmra.mrb[0].mxu0 %v118
  %v181 = vpop.f32.mrb[0].mxu0
  %v182 = vadd.f32 %v80, %v181
  %v183 = vpop.f32.mrb[0].mxu0
  %v184 = vpop.f32.mrb[0].mxu0
  %v185 = vadd.f32 %v85, %v184
  %v186 = vpop.f32.mrb[0].mxu0
  %187 = vdwg.mxu0
  %v188 = vpack.c.bf16 %v161, %v158
  %v189 = vpack.c.bf16 %v169, %v166
  %v190 = vpack.c.bf16 %v177, %v174
  %v191 = vpack.c.bf16 %v185, %v182
  %v192 = vtanh.bf16.pop %v188
  %v193 = vtanh.bf16.pop %v189
  %v194 = vtanh.bf16.pop %v190
  %v195 = vtanh.bf16.pop %v191
  %v196 = vld [vmem:[%s3] sm:$0xf]
  %v197 = vld [vmem:[%s3 + $0x4] sm:$0xf]
  %v198 = vld [vmem:[%s3 + $0x8] sm:$0xf]
  %v199 = vld [vmem:[%s3 + $0xc] sm:$0xf]
  %v200 = vld [vmem:[%s3 + $0x10] sm:$0xf]
  %v201 = vld [vmem:[%s3 + $0x14] sm:$0xf]
  %v202 = vld [vmem:[%s4] sm:$0xff]
  %v203 = vld [vmem:[%s4 + $0x8] sm:$0xff]
  %v204 = vld [vmem:[%s4 + $0x10] sm:$0xff]
  %v205 = vld [vmem:[%s4 + $0x18] sm:$0xff]
  %v206 = vld [vmem:[%s4 + $0x20] sm:$0xff]
  %v207 = vld [vmem:[%s4 + $0x28] sm:$0xff]
  %209 = vset.pattern.permute.xlu0 0
  %210 = vperm.xlu0 %209, %v202
  %v211 = vpop.permute.xlu0 %210
  %214 = vset.pattern.permute.xlu0 0
  %215 = vperm.xlu0 %214, %v203
  %v216 = vpop.permute.xlu0 %215
  %219 = vset.pattern.permute.xlu0 0
  %220 = vperm.xlu0 %219, %v204
  %v221 = vpop.permute.xlu0 %220
  %224 = vset.pattern.permute.xlu0 0
  %225 = vperm.xlu0 %224, %v205
  %v226 = vpop.permute.xlu0 %225
  %229 = vset.pattern.permute.xlu0 0
  %230 = vperm.xlu0 %229, %v206
  %v231 = vpop.permute.xlu0 %230
  %234 = vset.pattern.permute.xlu0 0
  %235 = vperm.xlu0 %234, %v207
  %v236 = vpop.permute.xlu0 %235
  %v244 = vunpack.c.l.b16 %v196
  %v245 = vunpack.c.l.b16 %v197
  %v246 = vunpack.c.l.b16 %v198
  %v247 = vunpack.c.l.b16 %v199
  %v248 = vunpack.c.l.b16 %v200
  %v249 = vunpack.c.l.b16 %v201
  %v250 = vpack.c.b16 %v245, %v244
  %v251 = vpack.c.b16 %v247, %v246
  %v252 = vpack.c.b16 %v249, %v248
  %vm253 = vcmask 523264
  %v255 = vsel %vm253, %v250, 0
  %v258 = vsel %vm253, %v251, 0
  %v261 = vsel %vm253, %v252, 0
  %263 = vmatprep.subr.bf16.mxu0 0
  %264 = vmatpush1.bf16.msra.mxu0 %v192
  %265 = vmatprep.subr.bf16.mxu0 0
  %266 = vmatpush1.bf16.msra.mxu0 %v193
  %267 = vmatprep.subr.bf16.mxu0 0
  %268 = vmatpush1.bf16.msra.mxu0 %v194
  %269 = vmatprep.subr.bf16.mxu0 0
  %270 = vmatpush1.bf16.msra.mxu0 %v195
  %271 = vmatprep.subr.bf16.mxu0 0
  %272 = vmatpush1.bf16.msra.mxu0 0
  %273 = vmatprep.subr.bf16.mxu0 0
  %274 = vmatpush1.bf16.msra.mxu0 0
  %275 = vmatprep.subr.bf16.mxu0 0
  %276 = vmatpush1.bf16.msra.mxu0 0
  %277 = vmatprep.subr.bf16.mxu0 0
  %278 = vmatpush1.bf16.msra.mxu0 0
  %279 = vmatprep.subr.bf16.mxu0 0
  %280 = vmatpush1.bf16.msra.mxu0 0
  %281 = vmatprep.subr.bf16.mxu0 0
  %282 = vmatpush1.bf16.msra.mxu0 0
  %283 = vmatprep.subr.bf16.mxu0 0
  %284 = vmatpush1.bf16.msra.mxu0 0
  %285 = vmatprep.subr.bf16.mxu0 0
  %286 = vmatpush1.bf16.msra.mxu0 0
  %287 = vmatprep.subr.bf16.mxu0 0
  %288 = vmatpush1.bf16.msra.mxu0 0
  %289 = vmatprep.subr.bf16.mxu0 0
  %290 = vmatpush1.bf16.msra.mxu0 0
  %291 = vmatprep.subr.bf16.mxu0 0
  %292 = vmatpush1.bf16.msra.mxu0 0
  %293 = vmatprep.subr.bf16.mxu0 0
  %294 = vmatpush1.bf16.msra.mxu0 0
  %295 = vmatprep.mubr.bf16.mxu0 0
  %296 = vmatmul.mubr.bf16.gmra.mrb[0].mxu0 %v255
  %v297 = vpop.f32.mrb[0].mxu0
  %v298 = vadd.f32 %v211, %v297
  %v299 = vpop.f32.mrb[0].mxu0
  %v300 = vpop.f32.mrb[0].mxu0
  %v301 = vadd.f32 %v216, %v300
  %v302 = vpop.f32.mrb[0].mxu0
  %303 = vmatprep.mubr.bf16.mxu0 0
  %304 = vmatmul.mubr.bf16.gmra.mrb[0].mxu0 %v258
  %v305 = vpop.f32.mrb[0].mxu0
  %v306 = vadd.f32 %v221, %v305
  %v307 = vpop.f32.mrb[0].mxu0
  %v308 = vpop.f32.mrb[0].mxu0
  %v309 = vadd.f32 %v226, %v308
  %v310 = vpop.f32.mrb[0].mxu0
  %311 = vmatprep.mubr.bf16.mxu0 0
  %312 = vmatmul.mubr.bf16.gmra.mrb[0].mxu0 %v261
  %v313 = vpop.f32.mrb[0].mxu0
  %v314 = vadd.f32 %v231, %v313
  %v315 = vpop.f32.mrb[0].mxu0
  %v316 = vpop.f32.mrb[0].mxu0
  %v317 = vadd.f32 %v236, %v316
  %v318 = vpop.f32.mrb[0].mxu0
  %319 = vdwg.mxu0
  %v320 = vpack.c.bf16 %v301, %v298
  %v321 = vpack.c.bf16 %v309, %v306
  %v322 = vpack.c.bf16 %v317, %v314
  %v323 = vtanh.bf16.pop %v320
  %v324 = vtanh.bf16.pop %v321
  %v325 = vtanh.bf16.pop %v322
  %v326 = vld [vmem:[%s5] sm:$0xf]
  %v327 = vld [vmem:[%s5 + $0x4] sm:$0xf]
  %v328 = vld [vmem:[%s6] sm:$0xff]
  %v329 = vld [vmem:[%s6 + $0x8] sm:$0xff]
  %331 = vset.pattern.permute.xlu0 0
  %332 = vperm.xlu0 %331, %v328
  %v333 = vpop.permute.xlu0 %332
  %336 = vset.pattern.permute.xlu0 0
  %337 = vperm.xlu0 %336, %v329
  %v338 = vpop.permute.xlu0 %337
  %v342 = vunpack.c.l.b16 %v326
  %v343 = vunpack.c.l.b16 %v327
  %v344 = vpack.c.b16 %v343, %v342
  %vm345 = vcmask 392192
  %v347 = vsel %vm345, %v344, 0
  %349 = vmatprep.subr.bf16.mxu0 0
  %350 = vmatpush1.bf16.msra.mxu0 %v323
  %351 = vmatprep.subr.bf16.mxu0 0
  %352 = vmatpush1.bf16.msra.mxu0 %v324
  %353 = vmatprep.subr.bf16.mxu0 0
  %354 = vmatpush1.bf16.msra.mxu0 %v325
  %355 = vmatprep.subr.bf16.mxu0 0
  %356 = vmatpush1.bf16.msra.mxu0 0
  %357 = vmatprep.subr.bf16.mxu0 0
  %358 = vmatpush1.bf16.msra.mxu0 0
  %359 = vmatprep.subr.bf16.mxu0 0
  %360 = vmatpush1.bf16.msra.mxu0 0
  %361 = vmatprep.subr.bf16.mxu0 0
  %362 = vmatpush1.bf16.msra.mxu0 0
  %363 = vmatprep.subr.bf16.mxu0 0
  %364 = vmatpush1.bf16.msra.mxu0 0
  %365 = vmatprep.subr.bf16.mxu0 0
  %366 = vmatpush1.bf16.msra.mxu0 0
  %367 = vmatprep.subr.bf16.mxu0 0
  %368 = vmatpush1.bf16.msra.mxu0 0
  %369 = vmatprep.subr.bf16.mxu0 0
  %370 = vmatpush1.bf16.msra.mxu0 0
  %371 = vmatprep.subr.bf16.mxu0 0
  %372 = vmatpush1.bf16.msra.mxu0 0
  %373 = vmatprep.subr.bf16.mxu0 0
  %374 = vmatpush1.bf16.msra.mxu0 0
  %375 = vmatprep.subr.bf16.mxu0 0
  %376 = vmatpush1.bf16.msra.mxu0 0
  %377 = vmatprep.subr.bf16.mxu0 0
  %378 = vmatpush1.bf16.msra.mxu0 0
  %379 = vmatprep.subr.bf16.mxu0 0
  %380 = vmatpush1.bf16.msra.mxu0 0
  %381 = vmatprep.mubr.bf16.mxu0 0
  %382 = vmatmul.mubr.bf16.gmra.mrb[0].mxu0 %v347
  %v383 = vpop.f32.mrb[0].mxu0
  %v384 = vadd.f32 %v333, %v383
  %v385 = vpop.f32.mrb[0].mxu0
  %v386 = vpop.f32.mrb[0].mxu0
  %v387 = vadd.f32 %v338, %v386
  %v388 = vpop.f32.mrb[0].mxu0
  %389 = vdwg.mxu0
  %v390 = vmul.f32 %v384, 0.5
  %v391 = vmul.f32 %v387, 0.5
  %v392 = vpack.c.bf16 %v391, %v390
  %v393 = vtanh.bf16.pop %v392
  %v394 = vadd.bf16 %v393, 1065369472
  %v395 = vmul.bf16 %v394, 1056980736
  %v397 = vunpack.c.l.b16 %v395
  %v398 = vunpack.c.h.b16 %v395
  %v399 = vpack.c.b16 %v397, %v397
  %v400 = vpack.c.b16 %v398, %v398
  %vm403 = vcmask 60416
  %404 = vst.msk [vmem:[%s7] sm:$0xf] %vm403, %v399
  %405 = vst.msk [vmem:[%s7 + $0x4] sm:$0xf] %vm403, %v400
  // Predicated region
  $region30: #{decoder_forward.1} parent=0 // pred_check
    _
  $region31: #{decoder_forward.1} parent=0 // pred_check_branch
    %407 = sbr.rel (0) target = $region33
  $region32: #{decoder_forward.1} parent=0 // pred_region
    _
  $region33: #{decoder_forward.1} parent=0 // pred_fallthru
    _
  // Predicated region
  $region34: #{decoder_forward.1} parent=0 // pred_check
    _
  $region35: #{decoder_forward.1} parent=0 // pred_check_branch
    %409 = sbr.rel (0) target = $region37
  $region36: #{decoder_forward.1} parent=0 // pred_region
    _
  $region37: #{decoder_forward.1} parent=0 // pred_fallthru
    _

</llo_original>
